<compile_context>
chip_gen: v7x
topology: tpu7x:2x2x1
jax: 0.10.0
libtpu: 0.0.40
codegen_flags: <defaults>
</compile_context>

<pallas_src>
import jax
import jax.numpy as jnp
from jax.experimental import pallas as pl
from jax.experimental.pallas import tpu as pltpu


def _layernorm_kernel(eps, n_feat):
    def kernel(x_ref, a_ref, b_ref, o_ref):
        x = x_ref[...].astype(jnp.float32)                       # (blk, F)
        mean = jnp.mean(x, axis=-1, keepdims=True)               # (blk, 1)
        diff = x - mean
        # torch.std uses Bessel's correction (divide by N-1)
        var = jnp.sum(diff * diff, axis=-1, keepdims=True) * (1.0 / (n_feat - 1))
        std = jnp.sqrt(var)
        # One reciprocal per row on the narrow column instead of dividing the
        # full (blk, F) tile element-wise.
        inv = pl.reciprocal(std + eps, approx=False)             # (blk, 1)
        a = a_ref[...].astype(jnp.float32)                       # (1, F)
        b = b_ref[...].astype(jnp.float32)                       # (1, F)
        y = (diff * inv) * a + b
        o_ref[...] = y.astype(o_ref.dtype)
    return kernel


def _sublane_pack(dtype):
    # Rows per sublane group for the dtype: f32 -> 8, bf16 -> 16, int8/fp8 -> 32.
    itemsize = jnp.dtype(dtype).itemsize
    return max(8, 32 // itemsize)


def layer_norm(x, a_2, b_2, eps=1e-12, target_tile_bytes=2 * 1024 * 1024):
    """x: [..., features]; a_2, b_2: [features]."""
    orig_shape = x.shape
    n_feat = orig_shape[-1]
    x2 = x.reshape(-1, n_feat)
    rows = x2.shape[0]

    pack = _sublane_pack(x.dtype)
    itemsize = jnp.dtype(x.dtype).itemsize

    # Biggest row tile that keeps one input block near target_tile_bytes,
    # aligned to the sublane packing. Double-buffered in + out tiles then use
    # ~4x this (<= ~8 MiB), comfortably inside every generation's scoped VMEM.
    block_rows = target_tile_bytes // (itemsize * n_feat)
    block_rows = max(pack, (block_rows // pack) * pack)
    rows_rounded = ((rows + pack - 1) // pack) * pack
    block_rows = min(block_rows, rows_rounded)

    grid = (pl.cdiv(rows, block_rows),)

    a2d = a_2.reshape(1, n_feat)
    b2d = b_2.reshape(1, n_feat)

    # TODO(synk): when n_feat < 128 the output stores are lane-masked
    # (vst.msk); folding 128//n_feat rows into the lane axis with a segmented
    # reduction would recover lane density, at the cost of kernel complexity.

    out = pl.pallas_call(
        _layernorm_kernel(float(eps), n_feat),
        out_shape=jax.ShapeDtypeStruct((rows, n_feat), x.dtype),
        grid_spec=pltpu.PrefetchScalarGridSpec(
            num_scalar_prefetch=0,
            grid=grid,
            in_specs=[
                pl.BlockSpec((block_rows, n_feat), lambda i: (i, 0)),
                pl.BlockSpec((1, n_feat), lambda i: (0, 0)),
                pl.BlockSpec((1, n_feat), lambda i: (0, 0)),
            ],
            out_specs=pl.BlockSpec((block_rows, n_feat), lambda i: (i, 0)),
        ),
        compiler_params=pltpu.CompilerParams(
            dimension_semantics=("parallel",),
            vmem_limit_bytes=32 * 1024 * 1024,
        ),
    )(x2, a2d, b2d)

    return out.reshape(orig_shape)


if __name__ == "__main__":
    # Small shapes consistent with the module: batch=2, seq=8, features=32
    B, S, F = 2, 8, 32
    key = jax.random.PRNGKey(0)
    x = jax.random.normal(key, (B, S, F), dtype=jnp.float32)

    # Parameter init matching nn.Parameter(torch.ones/zeros(features))
    a_2 = jnp.ones((F,), dtype=jnp.float32)
    b_2 = jnp.zeros((F,), dtype=jnp.float32)
    eps = 1e-12

    out = layer_norm(x, a_2, b_2, eps=eps)
    out = jax.block_until_ready(out)

    # Reference check in plain JAX (torch.std semantics: unbiased, eps on std)
    mean = jnp.mean(x, axis=-1, keepdims=True)
    std = jnp.sqrt(jnp.sum((x - mean) ** 2, axis=-1, keepdims=True) / (F - 1))
    ref = a_2 * (x - mean) / (std + eps) + b_2
    assert jnp.allclose(out, ref, atol=1e-5, rtol=1e-5), "mismatch vs reference"

    print("KERNEL_OK")
</pallas_src>

<mosaic_0001>
module attributes {stable_mosaic.version = 11 : i64} {
  func.func @kernel(%arg0: i32, %arg1: memref<16x32xf32, #tpu.memory_space<vmem>>, %arg2: memref<1x32xf32, #tpu.memory_space<vmem>>, %arg3: memref<1x32xf32, #tpu.memory_space<vmem>>, %arg4: memref<16x32xf32, #tpu.memory_space<vmem>>) attributes {dimension_semantics = [#tpu.dimension_semantics<parallel>], iteration_bounds = array<i64: 1>, scalar_prefetch = 0 : i64, scratch_operands = 0 : i64, tpu.core_type = #tpu.core_type<tc>, window_params = [{transform_indices = @transform_0, window_bounds = array<i64: 16, 32>}, {pipeline_mode = #tpu.pipeline_mode<synchronous>, transform_indices = @transform_1, window_bounds = array<i64: 1, 32>}, {pipeline_mode = #tpu.pipeline_mode<synchronous>, transform_indices = @transform_2, window_bounds = array<i64: 1, 32>}, {transform_indices = @transform_3, window_bounds = array<i64: 16, 32>}]} {
    %c0 = arith.constant 0 : index
    %c0_0 = arith.constant 0 : index
    %0 = vector.load %arg1[%c0, %c0_0] : memref<16x32xf32, #tpu.memory_space<vmem>>, vector<16x32xf32>
    %cst = arith.constant dense<0.000000e+00> : vector<16xf32>
    %1 = vector.multi_reduction <add>, %0, %cst [1] : vector<16x32xf32> to vector<16xf32>
    %2 = vector.shape_cast %1 : vector<16xf32> to vector<16x1xf32>
    %cst_1 = arith.constant 3.200000e+01 : f32
    %3 = vector.broadcast %cst_1 : f32 to vector<16x1xf32>
    %4 = arith.divf %2, %3 : vector<16x1xf32>
    %5 = vector.broadcast %4 : vector<16x1xf32> to vector<16x32xf32>
    %6 = arith.subf %0, %5 : vector<16x32xf32>
    %7 = arith.mulf %6, %6 : vector<16x32xf32>
    %cst_2 = arith.constant dense<0.000000e+00> : vector<16xf32>
    %8 = vector.multi_reduction <add>, %7, %cst_2 [1] : vector<16x32xf32> to vector<16xf32>
    %9 = vector.shape_cast %8 : vector<16xf32> to vector<16x1xf32>
    %cst_3 = arith.constant 0.0322580636 : f32
    %10 = vector.broadcast %cst_3 : f32 to vector<16x1xf32>
    %11 = arith.mulf %9, %10 : vector<16x1xf32>
    %12 = math.sqrt %11 : vector<16x1xf32>
    %cst_4 = arith.constant 9.99999996E-13 : f32
    %13 = vector.broadcast %cst_4 : f32 to vector<16x1xf32>
    %14 = arith.addf %12, %13 : vector<16x1xf32>
    %15 = tpu.reciprocal %14 : vector<16x1xf32> -> vector<16x1xf32>
    %c0_5 = arith.constant 0 : index
    %c0_6 = arith.constant 0 : index
    %16 = vector.load %arg2[%c0_5, %c0_6] : memref<1x32xf32, #tpu.memory_space<vmem>>, vector<1x32xf32>
    %c0_7 = arith.constant 0 : index
    %c0_8 = arith.constant 0 : index
    %17 = vector.load %arg3[%c0_7, %c0_8] : memref<1x32xf32, #tpu.memory_space<vmem>>, vector<1x32xf32>
    %18 = vector.broadcast %15 : vector<16x1xf32> to vector<16x32xf32>
    %19 = arith.mulf %6, %18 : vector<16x32xf32>
    %20 = vector.broadcast %16 : vector<1x32xf32> to vector<16x32xf32>
    %21 = arith.mulf %19, %20 : vector<16x32xf32>
    %22 = vector.broadcast %17 : vector<1x32xf32> to vector<16x32xf32>
    %23 = arith.addf %21, %22 : vector<16x32xf32>
    %c0_9 = arith.constant 0 : index
    %c0_10 = arith.constant 0 : index
    %24 = vector.load %arg4[%c0_9, %c0_10] : memref<16x32xf32, #tpu.memory_space<vmem>>, vector<16x32xf32>
    tpu.vector_store %arg4[%c0_9, %c0_10], %23 {strides = array<i32>} : memref<16x32xf32, #tpu.memory_space<vmem>>, vector<16x32xf32>,
    return
  }
  func.func @transform_0(%arg0: i32) -> (i32, i32) {
    %c0_i32 = arith.constant 0 : i32
    %c0_i32_0 = arith.constant 0 : i32
    return %arg0, %c0_i32 : i32, i32
  }
  func.func @transform_1(%arg0: i32) -> (i32, i32) {
    %c0_i32 = arith.constant 0 : i32
    %c0_i32_0 = arith.constant 0 : i32
    %c0_i32_1 = arith.constant 0 : i32
    return %c0_i32, %c0_i32_0 : i32, i32
  }
  func.func @transform_2(%arg0: i32) -> (i32, i32) {
    %c0_i32 = arith.constant 0 : i32
    %c0_i32_0 = arith.constant 0 : i32
    %c0_i32_1 = arith.constant 0 : i32
    return %c0_i32, %c0_i32_0 : i32, i32
  }
  func.func @transform_3(%arg0: i32) -> (i32, i32) {
    %c0_i32 = arith.constant 0 : i32
    %c0_i32_0 = arith.constant 0 : i32
    return %arg0, %c0_i32 : i32, i32
  }
}

</mosaic_0001>

<llo_original>
// kernel: tpu_custom_call.1
$region0: #{tpu_custom_call.1}
  #allocation0 [shape = 'u32[]', space=smem, size = 0x4, offset = 0x4, fixed_abs, tag = 'smem constant byte address 0x4 - core index']
  #allocation1 [shape = 'u32[144,128]{1,0:T(1,128)}', space=vmem, size = 0x12000, scoped, tag = 'internal scratch']
  %s0 = inlined_call_operand.hbm [shape: f32[16,32], index: 0, kind: input, shape index: {}]
  %s1 = inlined_call_operand.vmem [shape: f32[1,32], index: 1, kind: input, shape index: {}]
  %s2 = inlined_call_operand.vmem [shape: f32[1,32], index: 2, kind: input, shape index: {}]
  %s3 = inlined_call_operand.hbm [shape: f32[16,32], index: 3, kind: output, shape index: {}]
  %s4 = sld [smem:[#allocation0]]
  $region26: #{tpu_custom_call.1} parent=0
    _
  %s6 = ssub.s32 1, %s4
  %s7 = scalar_select 0, %s6, %s4
  $region1: #{tpu_custom_call.1} parent=0
    #allocation2 [shape = 'u8[8192]{0}', space=vmem, size = 0x2000, scoped, tag = 'input window, operand 0, single buffered']
    #allocation3 [shape = 's32[1]{0}', space=sflag, size = 0x4, scoped, tag = 'scoped memory for tpu_custom_call.1']
    #allocation4 [shape = 's32[1]{0}', space=sflag, size = 0x4, scoped, tag = 'scoped memory for tpu_custom_call.1']
    #allocation5 [shape = 'u8[8192]{0}', space=vmem, size = 0x2000, scoped, tag = 'output window, operand 0, single buffered']
    %8 = vsyncpa [#allocation3], 0
    %9 = vsyncpa [#allocation4], 0
    // Predicated region
    $region2: #{tpu_custom_call.1} parent=1 // pred_check
      _
    $region3: #{tpu_custom_call.1} parent=1 // pred_check_branch
      %11 = sbr.rel (0) target = $region5
    $region4: #{tpu_custom_call.1} parent=1 // pred_region
      %s13 = ssub.s32 256, 256
      %14 = vsyncadd [#allocation3], %s13
      %s15 = sshll.u32 [#allocation2], 4
      %s16 = int_to_ptr.vmem [resolvable:$true] %s15
      %21 = dma.hbm_to_vmem [thread:$0]  %s0, 256, %s16, [#allocation3], 128, 128, 8
    $region5: #{tpu_custom_call.1} parent=1 // pred_fallthru
      _
    // Predicated region
    $region6: #{tpu_custom_call.1} parent=1 // pred_check
      _
    $region7: #{tpu_custom_call.1} parent=1 // pred_check_branch
      %23 = sbr.rel (0) target = $region9
    $region8: #{tpu_custom_call.1} parent=1 // pred_region
      _
    $region9: #{tpu_custom_call.1} parent=1 // pred_fallthru
      _
    // Predicated region
    $region10: #{tpu_custom_call.1} parent=1 // pred_check
      _
    $region11: #{tpu_custom_call.1} parent=1 // pred_check_branch
      %25 = sbr.rel (0) target = $region13
    $region12: #{tpu_custom_call.1} parent=1 // pred_region
      _
    $region13: #{tpu_custom_call.1} parent=1 // pred_fallthru
      _
    // Predicated region
    $region14: #{tpu_custom_call.1} parent=1 // pred_check
      _
    $region15: #{tpu_custom_call.1} parent=1 // pred_check_branch
      %27 = sbr.rel (0) target = $region17
    $region16: #{tpu_custom_call.1} parent=1 // pred_region
      %28 = dma.done [#allocation3], 256
    $region17: #{tpu_custom_call.1} parent=1 // pred_fallthru
      _
    %v29 = vld [vmem:[#allocation2] sm:$0xff]
    %v30 = vld [vmem:[#allocation2 + $0x8] sm:$0xff]
    %vm31 = vcmask 261120
    %v32 = vsel %vm31, %v29, 0.0
    %33 = vadd.xlane.f32.xlu0 %v32
    %v34 = vpop.xlane.xlu0 %33
    %v35 = vsel %vm31, %v30, 0.0
    %36 = vadd.xlane.f32.xlu0 %v35
    %v37 = vpop.xlane.xlu0 %36
    %v38 = vrcp.pop 32.0
    %v39 = vmul.f32 %v34, %v38
    %v40 = vmul.f32 %v37, %v38
    %v41 = vsub.f32 %v29, %v39
    %v42 = vsub.f32 %v30, %v40
    %v43 = vmul.f32 %v41, %v41
    %v44 = vmul.f32 %v42, %v42
    %v45 = vsel %vm31, %v43, 0.0
    %46 = vadd.xlane.f32.xlu0 %v45
    %v47 = vpop.xlane.xlu0 %46
    %v48 = vsel %vm31, %v44, 0.0
    %49 = vadd.xlane.f32.xlu0 %v48
    %v50 = vpop.xlane.xlu0 %49
    %v51 = vmul.f32 %v47, 0.032258064
    %v52 = vmul.f32 %v50, 0.032258064
    %v53 = vrsqrt.pop %v51
    %v54 = vmul.f32 %v51, %v53
    %vm55 = vcmp.eq.f32.partialorder %v51, inf
    %v56 = vsel %vm55, %v51, %v54
    %vm57 = vcmp.eq.f32.partialorder %v51, 0.0
    %v58 = vand.u32 %v51, 2147483648
    %v59 = vsel %vm57, %v58, %v56
    %v60 = vrsqrt.pop %v52
    %v61 = vmul.f32 %v52, %v60
    %vm62 = vcmp.eq.f32.partialorder %v52, inf
    %v63 = vsel %vm62, %v52, %v61
    %vm64 = vcmp.eq.f32.partialorder %v52, 0.0
    %v65 = vand.u32 %v52, 2147483648
    %v66 = vsel %vm64, %v65, %v63
    %v67 = vadd.f32 %v59, 1e-12
    %v68 = vadd.f32 %v66, 1e-12
    %v69 = vrcp.pop %v67
    %v70 = vrcp.pop %v68
    %v71 = vld [vmem:[%s1] sm:$0x1]
    %v72 = vld [vmem:[%s2] sm:$0x1]
    %v73 = vmul.f32 %v41, %v69
    %v74 = vmul.f32 %v42, %v70
    %v76 = vlaneseq
    %v77 = vshrl.u32 %v76, 7
    %v78 = vsub.s32 0, %v77
    %v79 = vrot.slane %v71, %v78
    %v81 = vmul.f32 %v73, %v79
    %v82 = vmul.f32 %v74, %v79
    %v84 = vlaneseq
    %v85 = vshrl.u32 %v84, 7
    %v86 = vsub.s32 0, %v85
    %v87 = vrot.slane %v72, %v86
    %v89 = vadd.f32 %v81, %v87
    %v90 = vadd.f32 %v82, %v87
    %91 = vst.msk [vmem:[#allocation5] sm:$0xff] %vm31, %v89
    %92 = vst.msk [vmem:[#allocation5 + $0x8] sm:$0xff] %vm31, %v90
    // Predicated region
    $region18: #{tpu_custom_call.1} parent=1 // pred_check
      _
    $region19: #{tpu_custom_call.1} parent=1 // pred_check_branch
      %94 = sbr.rel (0) target = $region21
    $region20: #{tpu_custom_call.1} parent=1 // pred_region
      %s96 = ssub.s32 256, 256
      %97 = vsyncadd [#allocation4], %s96
      %s98 = sshll.u32 [#allocation5], 4
      %s99 = int_to_ptr.vmem [resolvable:$true] %s98
      %104 = dma.vmem_to_hbm [thread:$0]  %s99, 256, %s3, [#allocation4], 128, 128, 8
    $region21: #{tpu_custom_call.1} parent=1 // pred_fallthru
      _
    // Predicated region
    $region22: #{tpu_custom_call.1} parent=1 // pred_check
      _
    $region23: #{tpu_custom_call.1} parent=1 // pred_check_branch
      %106 = sbr.rel (0) target = $region25
    $region24: #{tpu_custom_call.1} parent=1 // pred_region
      %107 = dma.done [#allocation4], 256
    $region25: #{tpu_custom_call.1} parent=1 // pred_fallthru
      _
    %108 = vsyncpa [#allocation3], 1
    %109 = vsyncpa [#allocation4], 1

</llo_original>
